<compile_context>
chip_gen: v6e
topology: v6e:2x2x1
jax: 0.10.0
libtpu: 0.0.40
codegen_flags: <defaults>
</compile_context>

<pallas_src>
import functools

import jax
import jax.numpy as jnp
from jax import lax
from jax.experimental import pallas as pl
from jax.experimental.pallas import tpu as pltpu

# ---- deterministic "model_cfg" stand-in (no learnable parameters) -----------
PC_RANGE = (0.0, 0.0, 0.0, 8.0, 8.0, 4.0)   # x_min, y_min, z_min, x_max, y_max, z_max
VOXEL_SIZE = (0.5, 0.5)                     # BEV voxel size (dx, dy)
GRID_H = int(round((PC_RANGE[3] - PC_RANGE[0]) / VOXEL_SIZE[0]))  # 16
GRID_W = int(round((PC_RANGE[4] - PC_RANGE[1]) / VOXEL_SIZE[1]))  # 16
NUM_VOX = GRID_H * GRID_W                                         # 256
_INV_DX = 1.0 / VOXEL_SIZE[0]
_INV_DY = 1.0 / VOXEL_SIZE[1]


def _point2voxel_kernel(pts_ref, sums_ref, cnt_ref, *, num_points,
                        tiles_per_split):
    """Grid = (B, num_splits, tiles_per_split).  Scatter-add one point tile.

    pts_ref : (1, C, TN) f32   channel-major point tile (points on lanes).
    sums_ref: (1, 1, C, NUM_VOX) f32  per-voxel feature sums (resident acc).
    cnt_ref : (1, 1, 1, NUM_VOX) f32  per-voxel point counts (resident acc).
    """
    c = pts_ref.shape[1]              # feature channels (x, y, z, feat...)
    tn = pts_ref.shape[2]             # point-tile length
    s = pl.program_id(1)              # split index (parallel across cores)
    t = pl.program_id(2)              # tile index within the split (reduction)

    @pl.when(t == 0)
    def _():
        sums_ref[...] = jnp.zeros_like(sums_ref)
        cnt_ref[...] = jnp.zeros_like(cnt_ref)

    pts = pts_ref[0]                  # (C, TN) f32, points on lanes
    x = pts[0:1, :]                   # (1, TN) lane-dense rows
    y = pts[1:2, :]

    # Voxel coordinates from the *f32* coords (bit-identical binning to the
    # reference), clamped to the grid, flattened BEV index.
    vx = jnp.clip(jnp.floor((x - PC_RANGE[0]) * _INV_DX).astype(jnp.int32),
                  0, GRID_H - 1)
    vy = jnp.clip(jnp.floor((y - PC_RANGE[1]) * _INV_DY).astype(jnp.int32),
                  0, GRID_W - 1)
    flat = vx * GRID_W + vy           # (1, TN) int32 in [0, NUM_VOX)

    # Mask the zero-padding at the tail: send padded points to voxel -1, which
    # matches no voxel id, so they contribute neither to sums nor counts.
    lane = lax.broadcasted_iota(jnp.int32, (1, tn), 1)
    gidx = (s * tiles_per_split + t) * tn + lane
    flat = jnp.where(gidx < num_points, flat, -1)

    # One-hot with voxels on sublanes, points on lanes: (NUM_VOX, TN), bf16
    # (0/1 exact).  NOTE: an int32 iota is used for max lowering robustness; a
    # bf16 iota/compare is a further VMEM/VALU micro-opt (ids fit in bf16).
    vox_ids = lax.broadcasted_iota(jnp.int32, (NUM_VOX, tn), 0)
    onehot = (vox_ids == flat).astype(jnp.bfloat16)

    pts_bf = pts.astype(jnp.bfloat16)                 # (C, TN)
    ones_row = jnp.ones((1, tn), jnp.bfloat16)        # counts LHS, built here
                                                      # (no wrapper concat)

    # A.B^T contraction (contract the point/lane dim of both operands): the
    # attention q.k^T form -> one-hot consumed as transposed weights, no
    # materialized transpose.  bf16 operands -> single-pass MXU; f32 accumulate
    # via preferred_element_type (precision is therefore explicit).
    dims = (((1,), (1,)), ((), ()))
    feat = lax.dot_general(pts_bf, onehot, dims,
                           preferred_element_type=jnp.float32)   # (C, NUM_VOX)
    cnt = lax.dot_general(ones_row, onehot, dims,
                          preferred_element_type=jnp.float32)    # (1, NUM_VOX)

    sums_ref[0, 0] += feat
    cnt_ref[0, 0] += cnt


def point2voxel(batch_dict, *, tile_n=8192, num_splits=2):
    """JAX equivalent of Point2Voxel.forward(batch_dict).

    tile_n    : point-tile length (multiple of 128).  Default 8192 keeps the
                one-hot + temps well under the 32 MiB scoped-VMEM default and
                amortizes per-grid-step overhead; 16384 is fine on v5e/v6e.
    num_splits: independent partial accumulators over the point axis; the
                split axis is marked "parallel" so both v7x TensorCores work
                even at B=1 (use pltpu.CORE_PARALLEL there if plain "parallel"
                is not core-partitioned).  Overhead elsewhere is negligible.
    """
    points = batch_dict["points"]                      # (B, N, C) float32
    B, N, C = points.shape
    assert tile_n % 128 == 0

    tn = min(tile_n, 128 * pl.cdiv(N, 128))
    n_tiles = pl.cdiv(N, tn)
    tiles_per_split = pl.cdiv(n_tiles, num_splits)
    n_pad = num_splits * tiles_per_split * tn

    # Channel-major so the point tile is lane-dense and the MXU contraction is
    # the canonical attention-style form.  This is the only wrapper-side HBM
    # materialization left (see header TODO).
    pts_cm = jnp.transpose(points, (0, 2, 1))          # (B, C, N)
    if n_pad != N:
        pts_cm = jnp.pad(pts_cm, ((0, 0), (0, 0), (0, n_pad - N)))

    kernel = functools.partial(_point2voxel_kernel, num_points=N,
                               tiles_per_split=tiles_per_split)
    tps = tiles_per_split  # captured by the index maps below

    sums, cnts = pl.pallas_call(
        kernel,
        out_shape=(
            jax.ShapeDtypeStruct((B, num_splits, C, NUM_VOX), jnp.float32),
            jax.ShapeDtypeStruct((B, num_splits, 1, NUM_VOX), jnp.float32),
        ),
        grid_spec=pltpu.PrefetchScalarGridSpec(
            num_scalar_prefetch=0,
            grid=(B, num_splits, tiles_per_split),
            in_specs=[
                pl.BlockSpec((1, C, tn), lambda b, s, t: (b, 0, s * tps + t)),
            ],
            out_specs=(
                pl.BlockSpec((1, 1, C, NUM_VOX), lambda b, s, t: (b, s, 0, 0)),
                pl.BlockSpec((1, 1, 1, NUM_VOX), lambda b, s, t: (b, s, 0, 0)),
            ),
        ),
        compiler_params=pltpu.CompilerParams(
            dimension_semantics=("parallel", "parallel", "arbitrary"),
            vmem_limit_bytes=48 * 1024 * 1024,
        ),
    )(pts_cm)

    # Tiny (B, num_splits, C+1, 256) reduction + EXACT f32 divide in the
    # wrapper (replaces the in-kernel approx reciprocal).
    sums = jnp.sum(sums, axis=1)                       # (B, C, NUM_VOX)
    counts = jnp.sum(cnts, axis=1)[:, 0, :]            # (B, NUM_VOX), exact ints
    mean_cm = sums / jnp.maximum(counts, 1.0)[:, None, :]   # (B, C, NUM_VOX)

    # Channel-major kernel outputs -> NCHW is a pure reshape (no transpose).
    spatial_features = mean_cm.reshape(B, C, GRID_H, GRID_W)   # (B, C, H, W)
    occupancy = counts.reshape(B, 1, GRID_H, GRID_W)           # (B, 1, H, W)

    out = dict(batch_dict)
    out["voxel_features"] = jnp.transpose(mean_cm, (0, 2, 1))  # (B, NUM_VOX, C)
    out["voxel_num_points"] = counts                           # (B, NUM_VOX)
    out["spatial_features"] = spatial_features                 # NCHW
    out["occupancy"] = occupancy                               # NCHW
    return out


def _reference(points):
    """Pure-JAX reference for a quick correctness check."""
    B, N, C = points.shape
    vx = jnp.clip(jnp.floor((points[..., 0] - PC_RANGE[0]) * _INV_DX).astype(jnp.int32),
                  0, GRID_H - 1)
    vy = jnp.clip(jnp.floor((points[..., 1] - PC_RANGE[1]) * _INV_DY).astype(jnp.int32),
                  0, GRID_W - 1)
    flat = vx * GRID_W + vy                            # (B, N)

    def one_batch(p, f):
        s = jnp.zeros((NUM_VOX, C), jnp.float32).at[f].add(p)
        c = jnp.zeros((NUM_VOX,), jnp.float32).at[f].add(1.0)
        return s / jnp.maximum(c, 1.0)[:, None], c

    mean, cnt = jax.vmap(one_batch)(points, flat)
    return mean, cnt


if __name__ == "__main__":
    key = jax.random.PRNGKey(0)
    B, N, C = 2, 300, 4
    k1, k2 = jax.random.split(key)
    xyz = jax.random.uniform(
        k1, (B, N, 3), jnp.float32,
        minval=jnp.array(PC_RANGE[:3], jnp.float32),
        maxval=jnp.array(PC_RANGE[3:], jnp.float32))
    feat = jax.random.uniform(k2, (B, N, 1), jnp.float32)
    points = jnp.concatenate([xyz, feat], axis=-1)     # (B, N, 4)

    batch_dict = {"points": points}
    # tile_n=128, num_splits=2 with N=300 -> 2 tiles per split, padding in the
    # tail: exercises cross-tile accumulation, the split reduction and masking.
    out = point2voxel(batch_dict, tile_n=128, num_splits=2)
    jax.block_until_ready(out["spatial_features"])

    ref_mean, ref_cnt = _reference(points)
    # Counts are exact f32 integers (bf16 0/1 products, f32 accumulation).
    assert jnp.allclose(out["voxel_num_points"], ref_cnt, atol=1e-5)
    # Features carry only the ~2^-8 bf16 rounding of point values; binning and
    # the final division are exact f32.
    assert jnp.allclose(out["voxel_features"], ref_mean, atol=1e-2, rtol=1e-2)
    assert out["spatial_features"].shape == (B, C, GRID_H, GRID_W)
    assert out["occupancy"].shape == (B, 1, GRID_H, GRID_W)

    print("KERNEL_OK")
</pallas_src>

<mosaic_0001>
module attributes {stable_mosaic.version = 11 : i64} {
  func.func @_point2voxel_kernel(%arg0: i32, %arg1: i32, %arg2: i32, %arg3: memref<1x4x128xf32, #tpu.memory_space<vmem>>, %arg4: memref<1x1x4x256xf32, #tpu.memory_space<vmem>>, %arg5: memref<1x1x1x256xf32, #tpu.memory_space<vmem>>) attributes {dimension_semantics = [#tpu.dimension_semantics<parallel>, #tpu.dimension_semantics<parallel>, #tpu.dimension_semantics<arbitrary>], iteration_bounds = array<i64: 2, 2, 2>, scalar_prefetch = 0 : i64, scratch_operands = 0 : i64, tpu.core_type = #tpu.core_type<tc>, window_params = [{transform_indices = @transform_0, window_bounds = array<i64: 1, 4, 128>}, {transform_indices = @transform_1, window_bounds = array<i64: 1, 1, 4, 256>}, {transform_indices = @transform_2, window_bounds = array<i64: 1, 1, 1, 256>}]} {
    %c0_i32 = arith.constant 0 : i32
    %0 = arith.cmpi eq, %arg2, %c0_i32 : i32
    %1 = arith.extui %0 : i1 to i32
    %c0_i32_0 = arith.constant 0 : i32
    %2 = arith.cmpi ne, %1, %c0_i32_0 : i32
    scf.if %2 {
      %cst_28 = arith.constant 0.000000e+00 : f32
      %62 = vector.broadcast %cst_28 : f32 to vector<1x1x4x256xf32>
      %c0_29 = arith.constant 0 : index
      %c0_30 = arith.constant 0 : index
      %c0_31 = arith.constant 0 : index
      %c0_32 = arith.constant 0 : index
      %63 = vector.load %arg4[%c0_29, %c0_30, %c0_31, %c0_32] : memref<1x1x4x256xf32, #tpu.memory_space<vmem>>, vector<1x1x4x256xf32>
      tpu.vector_store %arg4[%c0_29, %c0_30, %c0_31, %c0_32], %62 {strides = array<i32>} : memref<1x1x4x256xf32, #tpu.memory_space<vmem>>, vector<1x1x4x256xf32>,
      %cst_33 = arith.constant 0.000000e+00 : f32
      %64 = vector.broadcast %cst_33 : f32 to vector<1x1x1x256xf32>
      %c0_34 = arith.constant 0 : index
      %c0_35 = arith.constant 0 : index
      %c0_36 = arith.constant 0 : index
      %c0_37 = arith.constant 0 : index
      %65 = vector.load %arg5[%c0_34, %c0_35, %c0_36, %c0_37] : memref<1x1x1x256xf32, #tpu.memory_space<vmem>>, vector<1x1x1x256xf32>
      tpu.vector_store %arg5[%c0_34, %c0_35, %c0_36, %c0_37], %64 {strides = array<i32>} : memref<1x1x1x256xf32, #tpu.memory_space<vmem>>, vector<1x1x1x256xf32>,
    } else {
    }
    %c0 = arith.constant 0 : index
    %c0_1 = arith.constant 0 : index
    %c0_2 = arith.constant 0 : index
    %3 = vector.load %arg3[%c0, %c0_1, %c0_2] : memref<1x4x128xf32, #tpu.memory_space<vmem>>, vector<1x4x128xf32>
    %4 = vector.shape_cast %3 : vector<1x4x128xf32> to vector<4x128xf32>
    %5 = vector.extract_strided_slice %4 {offsets = [0, 0], sizes = [1, 128], strides = [1, 1]} : vector<4x128xf32> to vector<1x128xf32>
    %6 = vector.extract_strided_slice %4 {offsets = [1, 0], sizes = [1, 128], strides = [1, 1]} : vector<4x128xf32> to vector<1x128xf32>
    %cst = arith.constant 0.000000e+00 : f32
    %7 = vector.broadcast %cst : f32 to vector<1x128xf32>
    %8 = arith.subf %5, %7 : vector<1x128xf32>
    %cst_3 = arith.constant 2.000000e+00 : f32
    %9 = vector.broadcast %cst_3 : f32 to vector<1x128xf32>
    %10 = arith.mulf %8, %9 : vector<1x128xf32>
    %11 = math.floor %10 : vector<1x128xf32>
    %12 = arith.fptosi %11 : vector<1x128xf32> to vector<1x128xi32>
    %c0_i32_4 = arith.constant 0 : i32
    %c15_i32 = arith.constant 15 : i32
    %13 = vector.broadcast %c0_i32_4 : i32 to vector<1x128xi32>
    %14 = arith.maxsi %13, %12 : vector<1x128xi32>
    %15 = vector.broadcast %c15_i32 : i32 to vector<1x128xi32>
    %16 = arith.minsi %15, %14 : vector<1x128xi32>
    %cst_5 = arith.constant 0.000000e+00 : f32
    %17 = vector.broadcast %cst_5 : f32 to vector<1x128xf32>
    %18 = arith.subf %6, %17 : vector<1x128xf32>
    %cst_6 = arith.constant 2.000000e+00 : f32
    %19 = vector.broadcast %cst_6 : f32 to vector<1x128xf32>
    %20 = arith.mulf %18, %19 : vector<1x128xf32>
    %21 = math.floor %20 : vector<1x128xf32>
    %22 = arith.fptosi %21 : vector<1x128xf32> to vector<1x128xi32>
    %c0_i32_7 = arith.constant 0 : i32
    %c15_i32_8 = arith.constant 15 : i32
    %23 = vector.broadcast %c0_i32_7 : i32 to vector<1x128xi32>
    %24 = arith.maxsi %23, %22 : vector<1x128xi32>
    %25 = vector.broadcast %c15_i32_8 : i32 to vector<1x128xi32>
    %26 = arith.minsi %25, %24 : vector<1x128xi32>
    %c16_i32 = arith.constant 16 : i32
    %27 = vector.broadcast %c16_i32 : i32 to vector<1x128xi32>
    %28 = arith.muli %16, %27 : vector<1x128xi32>
    %29 = arith.addi %28, %26 : vector<1x128xi32>
    %30 = tpu.iota {dimensions = array<i32: 1>} : vector<1x128xi32>
    %c2_i32 = arith.constant 2 : i32
    %31 = arith.muli %arg1, %c2_i32 : i32
    %32 = arith.addi %31, %arg2 : i32
    %c128_i32 = arith.constant 128 : i32
    %33 = arith.muli %32, %c128_i32 : i32
    %34 = vector.broadcast %33 : i32 to vector<1x128xi32>
    %35 = arith.addi %34, %30 : vector<1x128xi32>
    %c300_i32 = arith.constant 300 : i32
    %36 = vector.broadcast %c300_i32 : i32 to vector<1x128xi32>
    %37 = arith.cmpi slt, %35, %36 : vector<1x128xi32>
    %c-1_i32 = arith.constant -1 : i32
    %38 = vector.broadcast %c-1_i32 : i32 to vector<1x128xi32>
    %39 = arith.select %37, %29, %38 : vector<1x128xi1>, vector<1x128xi32>
    %40 = tpu.iota {dimensions = array<i32: 0>} : vector<256x128xi32>
    %41 = vector.broadcast %39 : vector<1x128xi32> to vector<256x128xi32>
    %42 = arith.cmpi eq, %40, %41 : vector<256x128xi32>
    %43 = arith.extui %42 : vector<256x128xi1> to vector<256x128xi32>
    %44 = arith.sitofp %43 : vector<256x128xi32> to vector<256x128xf32>
    %45 = arith.truncf %44 : vector<256x128xf32> to vector<256x128xbf16>
    %46 = arith.truncf %4 : vector<4x128xf32> to vector<4x128xbf16>
    %cst_9 = arith.constant 1.000000e+00 : bf16
    %47 = vector.broadcast %cst_9 : bf16 to vector<1x128xbf16>
    %cst_10 = arith.constant dense<0.000000e+00> : vector<4x256xf32>
    %48 = tpu.matmul %46, %45, %cst_10 {dimension_numbers = #tpu.dot_dimension_numbers<[1], [1], [0], [0], [0, 0, 1, 0], [], []>} : vector<4x128xbf16>, vector<256x128xbf16>, vector<4x256xf32> -> vector<4x256xf32>
    %cst_11 = arith.constant dense<0.000000e+00> : vector<1x256xf32>
    %49 = tpu.matmul %47, %45, %cst_11 {dimension_numbers = #tpu.dot_dimension_numbers<[1], [1], [0], [0], [0, 0, 1, 0], [], []>} : vector<1x128xbf16>, vector<256x128xbf16>, vector<1x256xf32> -> vector<1x256xf32>
    %c0_12 = arith.constant 0 : index
    %c0_13 = arith.constant 0 : index
    %c0_14 = arith.constant 0 : index
    %c0_15 = arith.constant 0 : index
    %50 = vector.load %arg4[%c0_12, %c0_13, %c0_14, %c0_15] : memref<1x1x4x256xf32, #tpu.memory_space<vmem>>, vector<1x1x4x256xf32>
    %51 = vector.shape_cast %50 : vector<1x1x4x256xf32> to vector<4x256xf32>
    %52 = arith.addf %51, %48 : vector<4x256xf32>
    %c0_16 = arith.constant 0 : index
    %c0_17 = arith.constant 0 : index
    %c0_18 = arith.constant 0 : index
    %c0_19 = arith.constant 0 : index
    %53 = vector.load %arg4[%c0_16, %c0_17, %c0_18, %c0_19] : memref<1x1x4x256xf32, #tpu.memory_space<vmem>>, vector<1x1x4x256xf32>
    %54 = vector.shape_cast %53 : vector<1x1x4x256xf32> to vector<4x256xf32>
    %55 = vector.shape_cast %52 : vector<4x256xf32> to vector<1x1x4x256xf32>
    tpu.vector_store %arg4[%c0_16, %c0_17, %c0_18, %c0_19], %55 {strides = array<i32>} : memref<1x1x4x256xf32, #tpu.memory_space<vmem>>, vector<1x1x4x256xf32>,
    %c0_20 = arith.constant 0 : index
    %c0_21 = arith.constant 0 : index
    %c0_22 = arith.constant 0 : index
    %c0_23 = arith.constant 0 : index
    %56 = vector.load %arg5[%c0_20, %c0_21, %c0_22, %c0_23] : memref<1x1x1x256xf32, #tpu.memory_space<vmem>>, vector<1x1x1x256xf32>
    %57 = vector.shape_cast %56 : vector<1x1x1x256xf32> to vector<1x256xf32>
    %58 = arith.addf %57, %49 : vector<1x256xf32>
    %c0_24 = arith.constant 0 : index
    %c0_25 = arith.constant 0 : index
    %c0_26 = arith.constant 0 : index
    %c0_27 = arith.constant 0 : index
    %59 = vector.load %arg5[%c0_24, %c0_25, %c0_26, %c0_27] : memref<1x1x1x256xf32, #tpu.memory_space<vmem>>, vector<1x1x1x256xf32>
    %60 = vector.shape_cast %59 : vector<1x1x1x256xf32> to vector<1x256xf32>
    %61 = vector.shape_cast %58 : vector<1x256xf32> to vector<1x1x1x256xf32>
    tpu.vector_store %arg5[%c0_24, %c0_25, %c0_26, %c0_27], %61 {strides = array<i32>} : memref<1x1x1x256xf32, #tpu.memory_space<vmem>>, vector<1x1x1x256xf32>,
    return
  }
  func.func @transform_0(%arg0: i32, %arg1: i32, %arg2: i32) -> (i32, i32, i32) {
    %c2_i32 = arith.constant 2 : i32
    %0 = arith.muli %arg1, %c2_i32 : i32
    %1 = arith.addi %0, %arg2 : i32
    %c0_i32 = arith.constant 0 : i32
    %c0_i32_0 = arith.constant 0 : i32
    return %arg0, %c0_i32, %1 : i32, i32, i32
  }
  func.func @transform_1(%arg0: i32, %arg1: i32, %arg2: i32) -> (i32, i32, i32, i32) {
    %c0_i32 = arith.constant 0 : i32
    %c0_i32_0 = arith.constant 0 : i32
    %c0_i32_1 = arith.constant 0 : i32
    return %arg0, %arg1, %c0_i32, %c0_i32_0 : i32, i32, i32, i32
  }
  func.func @transform_2(%arg0: i32, %arg1: i32, %arg2: i32) -> (i32, i32, i32, i32) {
    %c0_i32 = arith.constant 0 : i32
    %c0_i32_0 = arith.constant 0 : i32
    %c0_i32_1 = arith.constant 0 : i32
    return %arg0, %arg1, %c0_i32, %c0_i32_0 : i32, i32, i32, i32
  }
}

</mosaic_0001>

<llo_original>
// kernel: tpu_custom_call.1
$region0: #{tpu_custom_call.1}
  #allocation0 [shape = 'u32[]', space=smem, size = 0x4, offset = 0x4, fixed_abs, tag = 'smem constant byte address 0x4 - core index']
  #allocation1 [shape = 'u32[144,128]{1,0:T(1,128)}', space=vmem, size = 0x12000, scoped, tag = 'internal scratch']
  %s0 = inlined_call_operand.hbm [shape: f32[2,4,512], index: 0, kind: input, shape index: {}]
  %s1 = inlined_call_operand.hbm [shape: f32[2,2,4,256], index: 1, kind: output, shape index: {0}]
  %s2 = inlined_call_operand.hbm [shape: f32[2,2,1,256], index: 2, kind: output, shape index: {1}]
  %3 = xla_tuple %s1, %s2
  %s4 = sld [smem:[#allocation0]]
  $region53: #{tpu_custom_call.1} parent=0
    _
  %s6 = ssub.s32 1, %s4
  %s7 = scalar_select 0, %s6, %s4
  $region1: #{tpu_custom_call.1} parent=0
    #allocation2 [shape = 'u8[4096]{0}', space=vmem, size = 0x1000, scoped, tag = 'input window, operand 0']
    #allocation3 [shape = 's32[2]{0}', space=sflag, size = 0x8, scoped, tag = 'scoped memory for tpu_custom_call.1']
    #allocation4 [shape = 's32[2]{0}', space=sflag, size = 0x8, scoped, tag = 'scoped memory for tpu_custom_call.1']
    #allocation5 [shape = 'u8[8192]{0}', space=vmem, size = 0x2000, scoped, tag = 'output window, operand 0']
    #allocation6 [shape = 'u8[2048]{0}', space=vmem, size = 0x800, scoped, tag = 'output window, operand 1']
    #allocation7 [shape = 's32[2]{0}', space=sflag, size = 0x8, scoped, tag = 'scoped memory for tpu_custom_call.1']
    %8 = vsyncpa [#allocation3], 0
    %s9 = scalar_lea.sflag [#allocation3], 1
    %10 = vsyncpa %s9, 0
    %11 = vsyncpa [#allocation4], 0
    %s12 = scalar_lea.sflag [#allocation4], 1
    %13 = vsyncpa %s12, 0
    %14 = vsyncpa [#allocation7], 0
    %s15 = scalar_lea.sflag [#allocation7], 1
    %16 = vsyncpa %s15, 0
    loop: start=0, step=1, limit=10
    $region2: #{tpu_custom_call.1} parent=1 // loop_pre_header
      _
    $region3: #{tpu_custom_call.1} parent=1 // loop_header
      %s18 = sphi 0, %s22
      %p19 = scmp.ge.s32.totalorder %s18, 10
      %s25 = sphi 0, %s44
      %s26 = sphi 0, %s40
      %s27 = sphi 0, %s36
      %s28 = sphi 0, %s25
      %s29 = sphi 0, %s26
      %s30 = sphi 0, %s27
      %s31 = sphi 0, %s28
      %s32 = sphi 0, %s29
      %s33 = sphi 0, %s30
      %s53 = sphi 0, %s55
      %s56 = sphi 0, %s53
      %s57 = sphi 0, %s56
      %s73 = sphi 0, %s57
      %s81 = sphi 0, %s83
      %s84 = sphi 0, %s81
      %s85 = sphi 0, %s84
      %s101 = sphi 0, %s85
      %s109 = sphi 0, %s111
      %s112 = sphi 0, %s109
      %s113 = sphi 0, %s112
      %s129 = sphi 0, %s113
    $region4: #{tpu_custom_call.1} parent=1 // loop_header_branch
      %21 = sbr.rel (%p19) target = $region8
    $region5: #{tpu_custom_call.1} parent=1 // loop_body
      %s23 = ssub.s32 %s18, 1
      %s24 = ssub.s32 %s18, 2
      %s34 = sadd.s32 1, %s27
      %p35 = scmp.ge.s32.totalorder %s34, 2
      %s36 = scalar_select %p35, 0, %s34
      %s37 = sadd.s32 1, %s26
      %s38 = scalar_select %p35, %s37, %s26
      %p39 = scmp.ge.s32.totalorder %s38, 2
      %s40 = scalar_select %p39, 0, %s38
      %s41 = sadd.s32 1, %s25
      %s42 = scalar_select %p39, %s41, %s25
      %p43 = scmp.ge.s32.totalorder %s42, 2
      %s44 = scalar_select %p43, 0, %s42
      %s45 = smul.u32 %s26, 2
      %s46 = sadd.s32 %s45, %s27
      %s47 = smul.u32 %s40, 2
      %s48 = sadd.s32 %s47, %s36
      %s49 = ssub.s32 %s25, %s44
      %s50 = ssub.s32 %s46, %s48
      %s51 = sor.u32 %s49, %s50
      %p52 = scmp.eq.s32.totalorder %s51, 0
      %s54 = sadd.s32 %s53, 1
      %s55 = scalar_select %p52, %s53, %s54
      %p58 = pneg %p52
      %p59 = scmp.eq.s32.totalorder %s18, 7
      %p60 = por %p58, %p59
      %p61 = scmp.ne.s32.totalorder %s53, %s56
      %p62 = scmp.eq.s32.totalorder %s18, 0
      %p63 = por %p61, %p62
      %p64 = scmp.ne.s32.totalorder %s53, %s56
      %p65 = scmp.eq.s32.totalorder %s23, 7
      %p66 = por %p64, %p65
      %p67 = scmp.ne.s32.totalorder %s56, %s57
      %p68 = scmp.eq.s32.totalorder %s23, 0
      %p69 = por %p67, %p68
      %p70 = scmp.ne.s32.totalorder %s56, %s57
      %p71 = scmp.eq.s32.totalorder %s24, 7
      %p72 = por %p70, %p71
      %p74 = scmp.ne.s32.totalorder %s57, %s73
      %p75 = scmp.eq.s32.totalorder %s24, 0
      %p76 = por %p74, %p75
      %s77 = ssub.s32 %s25, %s44
      %s78 = ssub.s32 %s26, %s40
      %s79 = sor.u32 %s77, %s78
      %p80 = scmp.eq.s32.totalorder %s79, 0
      %s82 = sadd.s32 %s81, 1
      %s83 = scalar_select %p80, %s81, %s82
      %p86 = pneg %p80
      %p87 = scmp.eq.s32.totalorder %s18, 7
      %p88 = por %p86, %p87
      %p89 = scmp.ne.s32.totalorder %s81, %s84
      %p90 = scmp.eq.s32.totalorder %s18, 0
      %p91 = por %p89, %p90
      %p92 = scmp.ne.s32.totalorder %s81, %s84
      %p93 = scmp.eq.s32.totalorder %s23, 7
      %p94 = por %p92, %p93
      %p95 = scmp.ne.s32.totalorder %s84, %s85
      %p96 = scmp.eq.s32.totalorder %s23, 0
      %p97 = por %p95, %p96
      %p98 = scmp.ne.s32.totalorder %s84, %s85
      %p99 = scmp.eq.s32.totalorder %s24, 7
      %p100 = por %p98, %p99
      %p102 = scmp.ne.s32.totalorder %s85, %s101
      %p103 = scmp.eq.s32.totalorder %s24, 0
      %p104 = por %p102, %p103
      %s105 = ssub.s32 %s25, %s44
      %s106 = ssub.s32 %s26, %s40
      %s107 = sor.u32 %s105, %s106
      %p108 = scmp.eq.s32.totalorder %s107, 0
      %s110 = sadd.s32 %s109, 1
      %s111 = scalar_select %p108, %s109, %s110
      %p114 = pneg %p108
      %p115 = scmp.eq.s32.totalorder %s18, 7
      %p116 = por %p114, %p115
      %p117 = scmp.ne.s32.totalorder %s109, %s112
      %p118 = scmp.eq.s32.totalorder %s18, 0
      %p119 = por %p117, %p118
      %p120 = scmp.ne.s32.totalorder %s109, %s112
      %p121 = scmp.eq.s32.totalorder %s23, 7
      %p122 = por %p120, %p121
      %p123 = scmp.ne.s32.totalorder %s112, %s113
      %p124 = scmp.eq.s32.totalorder %s23, 0
      %p125 = por %p123, %p124
      %p126 = scmp.ne.s32.totalorder %s112, %s113
      %p127 = scmp.eq.s32.totalorder %s24, 7
      %p128 = por %p126, %p127
      %p130 = scmp.ne.s32.totalorder %s113, %s129
      %p131 = scmp.eq.s32.totalorder %s24, 0
      %p132 = por %p130, %p131
      %p133 = scmp.le.s32.totalorder 1, %s18
      %p134 = scmp.lt.s32.totalorder %s18, 9
      %p135 = pnand %p133, %p134
      %p136 = pneg %p135
      // Predicated region
      $region9: #{tpu_custom_call.1} parent=5 // pred_check
        _
      $region10: #{tpu_custom_call.1} parent=5 // pred_check_branch
        %138 = sbr.rel (%p135) target = $region12
      $region11: #{tpu_custom_call.1} parent=5 // pred_region
        %s139 = ssub.s32 %s18, 1
      $region12: #{tpu_custom_call.1} parent=5 // pred_fallthru
        _
      %p140 = scmp.lt.s32.totalorder %s18, 8
      // Predicated region
      $region13: #{tpu_custom_call.1} parent=5 // pred_check
        %p141 = pneg %p140
      $region14: #{tpu_custom_call.1} parent=5 // pred_check_branch
        %143 = sbr.rel (%p141) target = $region16
      $region15: #{tpu_custom_call.1} parent=5 // pred_region
        // Predicated region
        $region17: #{tpu_custom_call.1} parent=15 // pred_check
          %p144 = pneg %p63
        $region18: #{tpu_custom_call.1} parent=15 // pred_check_branch
          %146 = sbr.rel (%p144) target = $region20
        $region19: #{tpu_custom_call.1} parent=15 // pred_region
          %s147 = sand.u32 %s53, 1
          %s148 = scalar_lea.sflag [#allocation3], %s147
          %s149 = sand.u32 %s53, 1
          %s150 = smul.addr %s149, 4
          %s151 = scalar_lea.vmem [#allocation2], %s150
          %s152 = smul.u32 %s26, 2
          %s153 = sadd.s32 %s152, %s27
          %s155 = ssub.s32 64, 64
          %156 = vsyncadd %s148, %s155
          %s157 = smul.addr %s25, 4
          %s158 = sadd.s32 %s153, %s157
          %s159 = smul.addr %s158, 64
          %s160 = scalar_lea.hbm %s0, %s159
          %s162 = sshll.u32 %s151, 4
          %s163 = int_to_ptr.vmem [resolvable:$true] %s162
          %165 = dma.hbm_to_vmem [thread:$0]  %s160, 64, %s163, %s148
        $region20: #{tpu_custom_call.1} parent=15 // pred_fallthru
          _
      $region16: #{tpu_custom_call.1} parent=5 // pred_fallthru
        _
      %p166 = scmp.le.s32.totalorder 1, %s18
      %p167 = scmp.lt.s32.totalorder %s18, 9
      %p168 = pnand %p166, %p167
      %p169 = pneg %p168
      // Predicated region
      $region21: #{tpu_custom_call.1} parent=5 // pred_check
        _
      $region22: #{tpu_custom_call.1} parent=5 // pred_check_branch
        %171 = sbr.rel (%p168) target = $region24
      $region23: #{tpu_custom_call.1} parent=5 // pred_region
        %s172 = ssub.s32 %s18, 1
        %s173 = sand.u32 %s56, 1
        %s174 = scalar_lea.sflag [#allocation3], %s173
        %s175 = sand.u32 %s56, 1
        %s176 = smul.addr %s175, 4
        %s177 = scalar_lea.vmem [#allocation2], %s176
        // Predicated region
        $region25: #{tpu_custom_call.1} parent=23 // pred_check
          %p178 = pneg %p69
        $region26: #{tpu_custom_call.1} parent=23 // pred_check_branch
          %180 = sbr.rel (%p178) target = $region28
        $region27: #{tpu_custom_call.1} parent=23 // pred_region
          %181 = dma.done %s174, 64
        $region28: #{tpu_custom_call.1} parent=23 // pred_fallthru
          _
        %s182 = sand.u32 %s56, 1
        %s183 = scalar_lea.sflag [#allocation3], %s182
        %s184 = sand.u32 %s56, 1
        %s185 = smul.addr %s184, 4
        %s186 = scalar_lea.vmem [#allocation2], %s185
        %p187 = pneg %p69
        %p188 = pneg %p66
        %p189 = pneg %p97
        %p190 = pneg %p94
        %s191 = sand.u32 %s84, 1
        %s192 = scalar_lea.sflag [#allocation4], %s191
        %s193 = sand.u32 %s84, 1
        %s194 = smul.addr %s193, 8
        %s195 = scalar_lea.vmem [#allocation5], %s194
        %p196 = pneg %p125
        %p197 = pneg %p122
        %s198 = sand.u32 %s112, 1
        %s199 = scalar_lea.sflag [#allocation7], %s198
        %s200 = sand.u32 %s112, 1
        %s201 = smul.addr %s200, 2
        %s202 = scalar_lea.vmem [#allocation6], %s201
        %s203 = smul.u32 %s29, 2
        %s204 = sadd.s32 %s203, %s30
        %p207 = scmp.eq.s32.totalorder %s30, 0
        // Predicated region
        $region29: #{tpu_custom_call.1} parent=23 // pred_check
          %p208 = pneg %p207
        $region30: #{tpu_custom_call.1} parent=23 // pred_check_branch
          %210 = sbr.rel (%p208) target = $region32
        $region31: #{tpu_custom_call.1} parent=23 // pred_region
          %211 = vst [vmem:[%s195] sm:$0xff] 0.0
          %v212 = vlaneseq
          %vm213 = vcmp.ge.s32.totalorder %v212, 0
          %vm214 = vcmp.lt.s32.totalorder %v212, 256
          %vm215 = vmand %vm213, %vm214
          %216 = vst.msk [vmem:[%s202] sm:$0x3] %vm215, 0.0
        $region32: #{tpu_custom_call.1} parent=23 // pred_fallthru
          _
        %v217 = vld [vmem:[%s177] sm:$0xf]
        %v218 = vmul.f32 %v217, 2.0
        %v219 = vfloor.f32 %v218
        %v220 = vcvt.f32.s32.to.zero.pseudo %v219
        %vm221 = vcmp.gt.s32.totalorder %v220, 0
        %v222 = vsel %vm221, %v220, 0
        %vm223 = vcmp.lt.s32.totalorder %v222, 15
        %v224 = vsel %vm223, %v222, 15
        %v225 = vmul.u32 %v224, 16
        %v226 = vrot.slane %v224, 1
        %v227 = vadd.s32 %v225, %v226
        %v228 = vlaneseq
        %v229 = vand.u32 %v228, 127
        %s230 = smul.u32 %s29, 2
        %s231 = sadd.s32 %s230, %s30
        %s232 = smul.u32 %s231, 128
        %v233 = vstv %s232
        %v234 = vadd.s32 %v233, %v229
        %vm235 = vcmp.lt.s32.totalorder %v234, 300
        %v236 = vsel %vm235, %v227, 4294967295
        %v237 = vlaneseq
        %v238 = vshrl.u32 %v237, 7
        %v239 = vadd.s32 %v238, 8
        %v240 = vadd.s32 %v238, 16
        %v241 = vadd.s32 %v238, 24
        %v242 = vadd.s32 %v238, 32
        %v243 = vadd.s32 %v238, 40
        %v244 = vadd.s32 %v238, 48
        %v245 = vadd.s32 %v238, 56
        %v246 = vadd.s32 %v238, 64
        %v247 = vadd.s32 %v238, 72
        %v248 = vadd.s32 %v238, 80
        %v249 = vadd.s32 %v238, 88
        %v250 = vadd.s32 %v238, 96
        %v251 = vadd.s32 %v238, 104
        %v252 = vadd.s32 %v238, 112
        %v253 = vadd.s32 %v238, 120
        %v254 = vadd.s32 %v238, 128
        %v255 = vadd.s32 %v238, 136
        %v256 = vadd.s32 %v238, 144
        %v257 = vadd.s32 %v238, 152
        %v258 = vadd.s32 %v238, 160
        %v259 = vadd.s32 %v238, 168
        %v260 = vadd.s32 %v238, 176
        %v261 = vadd.s32 %v238, 184
        %v262 = vadd.s32 %v238, 192
        %v263 = vadd.s32 %v238, 200
        %v264 = vadd.s32 %v238, 208
        %v265 = vadd.s32 %v238, 216
        %v266 = vadd.s32 %v238, 224
        %v267 = vadd.s32 %v238, 232
        %v268 = vadd.s32 %v238, 240
        %v269 = vadd.s32 %v238, 248
        %v270 = vlaneseq
        %v271 = vshrl.u32 %v270, 7
        %v272 = vsub.s32 0, %v271
        %v273 = vrot.slane %v236, %v272
        %vm274 = vcmp.eq.s32.totalorder %v238, %v273
        %vm275 = vcmp.eq.s32.totalorder %v239, %v273
        %vm276 = vcmp.eq.s32.totalorder %v240, %v273
        %vm277 = vcmp.eq.s32.totalorder %v241, %v273
        %vm278 = vcmp.eq.s32.totalorder %v242, %v273
        %vm279 = vcmp.eq.s32.totalorder %v243, %v273
        %vm280 = vcmp.eq.s32.totalorder %v244, %v273
        %vm281 = vcmp.eq.s32.totalorder %v245, %v273
        %vm282 = vcmp.eq.s32.totalorder %v246, %v273
        %vm283 = vcmp.eq.s32.totalorder %v247, %v273
        %vm284 = vcmp.eq.s32.totalorder %v248, %v273
        %vm285 = vcmp.eq.s32.totalorder %v249, %v273
        %vm286 = vcmp.eq.s32.totalorder %v250, %v273
        %vm287 = vcmp.eq.s32.totalorder %v251, %v273
        %vm288 = vcmp.eq.s32.totalorder %v252, %v273
        %vm289 = vcmp.eq.s32.totalorder %v253, %v273
        %vm290 = vcmp.eq.s32.totalorder %v254, %v273
        %vm291 = vcmp.eq.s32.totalorder %v255, %v273
        %vm292 = vcmp.eq.s32.totalorder %v256, %v273
        %vm293 = vcmp.eq.s32.totalorder %v257, %v273
        %vm294 = vcmp.eq.s32.totalorder %v258, %v273
        %vm295 = vcmp.eq.s32.totalorder %v259, %v273
        %vm296 = vcmp.eq.s32.totalorder %v260, %v273
        %vm297 = vcmp.eq.s32.totalorder %v261, %v273
        %vm298 = vcmp.eq.s32.totalorder %v262, %v273
        %vm299 = vcmp.eq.s32.totalorder %v263, %v273
        %vm300 = vcmp.eq.s32.totalorder %v264, %v273
        %vm301 = vcmp.eq.s32.totalorder %v265, %v273
        %vm302 = vcmp.eq.s32.totalorder %v266, %v273
        %vm303 = vcmp.eq.s32.totalorder %v267, %v273
        %vm304 = vcmp.eq.s32.totalorder %v268, %v273
        %vm305 = vcmp.eq.s32.totalorder %v269, %v273
        %v306 = vsel %vm274, 1, 0
        %v307 = vsel %vm275, 1, 0
        %v308 = vsel %vm276, 1, 0
        %v309 = vsel %vm277, 1, 0
        %v310 = vsel %vm278, 1, 0
        %v311 = vsel %vm279, 1, 0
        %v312 = vsel %vm280, 1, 0
        %v313 = vsel %vm281, 1, 0
        %v314 = vsel %vm282, 1, 0
        %v315 = vsel %vm283, 1, 0
        %v316 = vsel %vm284, 1, 0
        %v317 = vsel %vm285, 1, 0
        %v318 = vsel %vm286, 1, 0
        %v319 = vsel %vm287, 1, 0
        %v320 = vsel %vm288, 1, 0
        %v321 = vsel %vm289, 1, 0
        %v322 = vsel %vm290, 1, 0
        %v323 = vsel %vm291, 1, 0
        %v324 = vsel %vm292, 1, 0
        %v325 = vsel %vm293, 1, 0
        %v326 = vsel %vm294, 1, 0
        %v327 = vsel %vm295, 1, 0
        %v328 = vsel %vm296, 1, 0
        %v329 = vsel %vm297, 1, 0
        %v330 = vsel %vm298, 1, 0
        %v331 = vsel %vm299, 1, 0
        %v332 = vsel %vm300, 1, 0
        %v333 = vsel %vm301, 1, 0
        %v334 = vsel %vm302, 1, 0
        %v335 = vsel %vm303, 1, 0
        %v336 = vsel %vm304, 1, 0
        %v337 = vsel %vm305, 1, 0
        %v338 = vcvt.s32.f32 %v306
        %v339 = vcvt.s32.f32 %v307
        %v340 = vcvt.s32.f32 %v308
        %v341 = vcvt.s32.f32 %v309
        %v342 = vcvt.s32.f32 %v310
        %v343 = vcvt.s32.f32 %v311
        %v344 = vcvt.s32.f32 %v312
        %v345 = vcvt.s32.f32 %v313
        %v346 = vcvt.s32.f32 %v314
        %v347 = vcvt.s32.f32 %v315
        %v348 = vcvt.s32.f32 %v316
        %v349 = vcvt.s32.f32 %v317
        %v350 = vcvt.s32.f32 %v318
        %v351 = vcvt.s32.f32 %v319
        %v352 = vcvt.s32.f32 %v320
        %v353 = vcvt.s32.f32 %v321
        %v354 = vcvt.s32.f32 %v322
        %v355 = vcvt.s32.f32 %v323
        %v356 = vcvt.s32.f32 %v324
        %v357 = vcvt.s32.f32 %v325
        %v358 = vcvt.s32.f32 %v326
        %v359 = vcvt.s32.f32 %v327
        %v360 = vcvt.s32.f32 %v328
        %v361 = vcvt.s32.f32 %v329
        %v362 = vcvt.s32.f32 %v330
        %v363 = vcvt.s32.f32 %v331
        %v364 = vcvt.s32.f32 %v332
        %v365 = vcvt.s32.f32 %v333
        %v366 = vcvt.s32.f32 %v334
        %v367 = vcvt.s32.f32 %v335
        %v368 = vcvt.s32.f32 %v336
        %v369 = vcvt.s32.f32 %v337
        %v370 = vpack.c.bf16 %v339, %v338
        %v371 = vpack.c.bf16 %v341, %v340
        %v372 = vpack.c.bf16 %v343, %v342
        %v373 = vpack.c.bf16 %v345, %v344
        %v374 = vpack.c.bf16 %v347, %v346
        %v375 = vpack.c.bf16 %v349, %v348
        %v376 = vpack.c.bf16 %v351, %v350
        %v377 = vpack.c.bf16 %v353, %v352
        %v378 = vpack.c.bf16 %v355, %v354
        %v379 = vpack.c.bf16 %v357, %v356
        %v380 = vpack.c.bf16 %v359, %v358
        %v381 = vpack.c.bf16 %v361, %v360
        %v382 = vpack.c.bf16 %v363, %v362
        %v383 = vpack.c.bf16 %v365, %v364
        %v384 = vpack.c.bf16 %v367, %v366
        %v385 = vpack.c.bf16 %v369, %v368
        %v386 = vpack.c.bf16 %v217, %v217
        %387 = vmatprep.subr.bf16.mxu0 0
        %388 = vmatpush1.bf16.xpose.msra.mxu0 %v377
        %389 = vmatprep.subr.bf16.mxu0 0
        %390 = vmatpush1.bf16.xpose.msra.mxu0 %v376
        %391 = vmatprep.subr.bf16.mxu0 0
        %392 = vmatpush1.bf16.xpose.msra.mxu0 %v375
        %393 = vmatprep.subr.bf16.mxu0 0
        %394 = vmatpush1.bf16.xpose.msra.mxu0 %v374
        %395 = vmatprep.subr.bf16.mxu0 0
        %396 = vmatpush1.bf16.xpose.msra.mxu0 %v373
        %397 = vmatprep.subr.bf16.mxu0 0
        %398 = vmatpush1.bf16.xpose.msra.mxu0 %v372
        %399 = vmatprep.subr.bf16.mxu0 0
        %400 = vmatpush1.bf16.xpose.msra.mxu0 %v371
        %401 = vmatprep.subr.bf16.mxu0 0
        %402 = vmatpush1.bf16.xpose.msra.mxu0 %v370
        %403 = vmatprep.subr.bf16.mxu0 0
        %404 = vmatpush2.bf16.xpose.msra.mxu0 %v385
        %405 = vmatprep.subr.bf16.mxu0 0
        %406 = vmatpush2.bf16.xpose.msra.mxu0 %v384
        %407 = vmatprep.subr.bf16.mxu0 0
        %408 = vmatpush2.bf16.xpose.msra.mxu0 %v383
        %409 = vmatprep.subr.bf16.mxu0 0
        %410 = vmatpush2.bf16.xpose.msra.mxu0 %v382
        %411 = vmatprep.subr.bf16.mxu0 0
        %412 = vmatpush2.bf16.xpose.msra.mxu0 %v381
        %413 = vmatprep.subr.bf16.mxu0 0
        %414 = vmatpush2.bf16.xpose.msra.mxu0 %v380
        %415 = vmatprep.subr.bf16.mxu0 0
        %416 = vmatpush2.bf16.xpose.msra.mxu0 %v379
        %417 = vmatprep.subr.bf16.mxu0 0
        %418 = vmatpush2.bf16.xpose.msra.mxu0 %v378
        %419 = vmatprep.mubr.bf16.mxu0 0
        %420 = vmatmul.mubr.bf16.gmra.mxu0 %v386
        %v421 = vpop.f32.mrf.mxu0
        %v422 = vadd.f32 0.0, %v421
        %v423 = vpop.f32.mrf.mxu0
        %v424 = vadd.f32 0.0, %v423
        %v425 = vpop.f32.mrf.mxu0
        %v426 = vpop.f32.mrf.mxu0
        %427 = vdwg.mxu0
        %428 = vmatprep.subr.bf16.mxu0 0
        %429 = vmatpush1.bf16.xpose.msra.mxu0 %v377
        %430 = vmatprep.subr.bf16.mxu0 0
        %431 = vmatpush1.bf16.xpose.msra.mxu0 %v376
        %432 = vmatprep.subr.bf16.mxu0 0
        %433 = vmatpush1.bf16.xpose.msra.mxu0 %v375
        %434 = vmatprep.subr.bf16.mxu0 0
        %435 = vmatpush1.bf16.xpose.msra.mxu0 %v374
        %436 = vmatprep.subr.bf16.mxu0 0
        %437 = vmatpush1.bf16.xpose.msra.mxu0 %v373
        %438 = vmatprep.subr.bf16.mxu0 0
        %439 = vmatpush1.bf16.xpose.msra.mxu0 %v372
        %440 = vmatprep.subr.bf16.mxu0 0
        %441 = vmatpush1.bf16.xpose.msra.mxu0 %v371
        %442 = vmatprep.subr.bf16.mxu0 0
        %443 = vmatpush1.bf16.xpose.msra.mxu0 %v370
        %444 = vmatprep.subr.bf16.mxu0 0
        %445 = vmatpush2.bf16.xpose.msra.mxu0 %v385
        %446 = vmatprep.subr.bf16.mxu0 0
        %447 = vmatpush2.bf16.xpose.msra.mxu0 %v384
        %448 = vmatprep.subr.bf16.mxu0 0
        %449 = vmatpush2.bf16.xpose.msra.mxu0 %v383
        %450 = vmatprep.subr.bf16.mxu0 0
        %451 = vmatpush2.bf16.xpose.msra.mxu0 %v382
        %452 = vmatprep.subr.bf16.mxu0 0
        %453 = vmatpush2.bf16.xpose.msra.mxu0 %v381
        %454 = vmatprep.subr.bf16.mxu0 0
        %455 = vmatpush2.bf16.xpose.msra.mxu0 %v380
        %456 = vmatprep.subr.bf16.mxu0 0
        %457 = vmatpush2.bf16.xpose.msra.mxu0 %v379
        %458 = vmatprep.subr.bf16.mxu0 0
        %459 = vmatpush2.bf16.xpose.msra.mxu0 %v378
        %460 = vmatprep.mubr.bf16.mxu0 0
        %461 = vmatmul.mubr.bf16.gmra.mxu0 1065369472
        %v462 = vpop.f32.mrf.mxu0
        %v463 = vadd.f32 0.0, %v462
        %v464 = vpop.f32.mrf.mxu0
        %v465 = vadd.f32 0.0, %v464
        %v466 = vpop.f32.mrf.mxu0
        %v467 = vpop.f32.mrf.mxu0
        %468 = vdwg.mxu0
        %v469 = vld [vmem:[%s195] sm:$0xff]
        %v472 = vcombine.low %v422, %v424
        %v474 = vadd.f32 %v469, %v472
        %475 = vst [vmem:[%s195] sm:$0xff] %v474
        %v476 = vld [vmem:[%s202] sm:$0x3]
        %v479 = vcombine.low %v463, %v465
        %v481 = vunpack.c.l.s4 1966171168
        %v482 = vunpack.c.0.s8 %v481
        %v483 = vlaneseq
        %v484 = vshrl.u32 %v483, 7
        %v485 = vsub.s32 %v482, %v484
        %v486 = vrot.slane %v479, %v485
        %v488 = vunpack.c.l.s4 1966171168
        %v489 = vunpack.c.0.s8 %v488
        %v490 = vlaneseq
        %v491 = vshrl.u32 %v490, 7
        %v492 = vsub.s32 %v489, %v491
        %v493 = vrot.slane %v486, %v492
        %v495 = vadd.f32 %v476, %v493
        %v496 = vlaneseq
        %vm497 = vcmp.ge.s32.totalorder %v496, 0
        %vm498 = vcmp.lt.s32.totalorder %v496, 256
        %vm499 = vmand %vm497, %vm498
        %500 = vst.msk [vmem:[%s202] sm:$0x3] %vm499, %v495
        %s501 = sand.u32 %s84, 1
        %s502 = scalar_lea.sflag [#allocation4], %s501
        %s503 = sand.u32 %s84, 1
        %s504 = smul.addr %s503, 8
        %s505 = scalar_lea.vmem [#allocation5], %s504
        %s506 = sand.u32 %s112, 1
        %s507 = scalar_lea.sflag [#allocation7], %s506
        %s508 = sand.u32 %s112, 1
        %s509 = smul.addr %s508, 2
        %s510 = scalar_lea.vmem [#allocation6], %s509
        // Predicated region
        $region33: #{tpu_custom_call.1} parent=23 // pred_check
          %p511 = pneg %p94
        $region34: #{tpu_custom_call.1} parent=23 // pred_check_branch
          %513 = sbr.rel (%p511) target = $region36
        $region35: #{tpu_custom_call.1} parent=23 // pred_region
          %s515 = ssub.s32 128, 128
          %516 = vsyncadd %s502, %s515
          %s517 = smul.addr %s29, 2
          %s518 = smul.addr %s28, 4
          %s519 = sadd.s32 %s517, %s518
          %s520 = smul.addr %s519, 64
          %s521 = scalar_lea.hbm %s1, %s520
          %s523 = sshll.u32 %s505, 4
          %s524 = int_to_ptr.vmem [resolvable:$true] %s523
          %526 = dma.vmem_to_hbm [thread:$0]  %s524, 128, %s521, %s502
        $region36: #{tpu_custom_call.1} parent=23 // pred_fallthru
          _
        // Predicated region
        $region37: #{tpu_custom_call.1} parent=23 // pred_check
          %p527 = pneg %p122
        $region38: #{tpu_custom_call.1} parent=23 // pred_check_branch
          %529 = sbr.rel (%p527) target = $region40
        $region39: #{tpu_custom_call.1} parent=23 // pred_region
          %s531 = ssub.s32 32, 32
          %532 = vsyncadd %s507, %s531
          %s533 = smul.addr %s29, 2
          %s534 = smul.addr %s28, 4
          %s535 = sadd.s32 %s533, %s534
          %s536 = smul.addr %s535, 16
          %s537 = scalar_lea.hbm %s2, %s536
          %s539 = sshll.u32 %s510, 4
          %s540 = int_to_ptr.vmem [resolvable:$true] %s539
          %542 = dma.vmem_to_hbm [thread:$0]  %s540, 32, %s537, %s507
        $region40: #{tpu_custom_call.1} parent=23 // pred_fallthru
          _
      $region24: #{tpu_custom_call.1} parent=5 // pred_fallthru
        _
      %p543 = scmp.le.s32.totalorder 2, %s18
      // Predicated region
      $region41: #{tpu_custom_call.1} parent=5 // pred_check
        %p544 = pneg %p543
      $region42: #{tpu_custom_call.1} parent=5 // pred_check_branch
        %546 = sbr.rel (%p544) target = $region44
      $region43: #{tpu_custom_call.1} parent=5 // pred_region
        %s547 = ssub.s32 %s18, 2
        // Predicated region
        $region45: #{tpu_custom_call.1} parent=43 // pred_check
          %p548 = pneg %p100
        $region46: #{tpu_custom_call.1} parent=43 // pred_check_branch
          %550 = sbr.rel (%p548) target = $region48
        $region47: #{tpu_custom_call.1} parent=43 // pred_region
          %s551 = sand.u32 %s85, 1
          %s552 = scalar_lea.sflag [#allocation4], %s551
          %s553 = sand.u32 %s85, 1
          %s554 = smul.addr %s553, 8
          %s555 = scalar_lea.vmem [#allocation5], %s554
          %556 = dma.done %s552, 128
        $region48: #{tpu_custom_call.1} parent=43 // pred_fallthru
          _
        // Predicated region
        $region49: #{tpu_custom_call.1} parent=43 // pred_check
          %p557 = pneg %p128
        $region50: #{tpu_custom_call.1} parent=43 // pred_check_branch
          %559 = sbr.rel (%p557) target = $region52
        $region51: #{tpu_custom_call.1} parent=43 // pred_region
          %s560 = sand.u32 %s113, 1
          %s561 = scalar_lea.sflag [#allocation7], %s560
          %s562 = sand.u32 %s113, 1
          %s563 = smul.addr %s562, 2
          %s564 = scalar_lea.vmem [#allocation6], %s563
          %565 = dma.done %s561, 32
        $region52: #{tpu_custom_call.1} parent=43 // pred_fallthru
          _
      $region44: #{tpu_custom_call.1} parent=5 // pred_fallthru
        _
    $region6: #{tpu_custom_call.1} parent=1 // loop_footer
      %s22 = sadd.s32 1, %s18
    $region7: #{tpu_custom_call.1} parent=1 // loop_footer_branch
      %17 = sbr.rel target = $region3
    $region8: #{tpu_custom_call.1} parent=1 // loop_exit
      _
    %566 = vsyncpa [#allocation3], 1
    %s567 = scalar_lea.sflag [#allocation3], 1
    %568 = vsyncpa %s567, 1
    %569 = vsyncpa [#allocation4], 1
    %s570 = scalar_lea.sflag [#allocation4], 1
    %571 = vsyncpa %s570, 1
    %572 = vsyncpa [#allocation7], 1
    %s573 = scalar_lea.sflag [#allocation7], 1
    %574 = vsyncpa %s573, 1

</llo_original>
